<compile_context>
chip_gen: v7x
topology: tpu7x:2x2x1
jax: 0.10.0
libtpu: 0.0.40
codegen_flags: <defaults>
</compile_context>

<pallas_src>
import functools

import jax
import jax.numpy as jnp
import numpy as np
from jax import lax
from jax.experimental import pallas as pl
from jax.experimental.pallas import tpu as pltpu


# ----------------------------------------------------------------------------
# Pallas kernel: one grid step handles one (batch, head) pair, full sequence.
# ----------------------------------------------------------------------------
def _attention_kernel(x_ref, wqkv_ref, bq_ref, bias_ref, wproj_ref, bproj_ref,
                      o_ref, acc_ref, *, head_dim):
    # x_ref:     (1, N, C)   activations for this batch element (f32)
    # wqkv_ref:  (1, C, 3D)  this head's fused q|k|v weight, bf16 (scale in q)
    # bq_ref:    (1, 1, D)   this head's q bias, f32 (scale folded in)
    # bias_ref:  (1, N, N)   this head's relative position bias, bf16
    # wproj_ref: (1, D, C)   this head's slab of the output projection, bf16
    # bproj_ref: (1, C)      output projection bias, f32 (bv-fold included)
    # o_ref:     (1, N, C)   output block (resident across the head grid axis)
    # acc_ref:   (N, C) f32  VMEM scratch accumulator (fused head-concat+proj)
    h = pl.program_id(1)
    D = head_dim

    @pl.when(h == 0)
    def _():
        acc_ref[...] = jnp.zeros_like(acc_ref)

    x = x_ref[0].astype(jnp.bfloat16)                           # (N, C)

    # Lane-dense fused projection: one (N,C) @ (C,3D) MXU matmul per head.
    qkv = jnp.dot(x, wqkv_ref[0], preferred_element_type=jnp.float32)  # (N, 3D)
    q = qkv[:, 0 * D:1 * D] + bq_ref[0]                         # (N, D) f32
    k = qkv[:, 1 * D:2 * D]                                     # bk dropped
    v = qkv[:, 2 * D:3 * D]                                     # bv folded into bproj

    # q @ k^T via dot_general dimension numbers (no transpose materialized).
    attn = lax.dot_general(
        q.astype(jnp.bfloat16), k.astype(jnp.bfloat16),
        (((1,), (1,)), ((), ())),
        preferred_element_type=jnp.float32)                     # (N, N) f32
    attn = attn + bias_ref[0].astype(jnp.float32)

    # Softmax along the last axis in f32; divide via EUP approx reciprocal.
    attn = attn - jnp.max(attn, axis=-1, keepdims=True)
    attn = jnp.exp(attn)
    attn = attn * pl.reciprocal(jnp.sum(attn, axis=-1, keepdims=True),
                                approx=True)

    # (attn @ v_h) then straight through this head's slab of the output
    # projection -- fuses the head concat into the projection.
    pv = jnp.dot(attn.astype(jnp.bfloat16), v.astype(jnp.bfloat16),
                 preferred_element_type=jnp.float32)            # (N, D)
    acc_ref[...] += jnp.dot(pv.astype(jnp.bfloat16), wproj_ref[0],
                            preferred_element_type=jnp.float32)  # (N, C)

    @pl.when(h == pl.num_programs(1) - 1)
    def _():
        o_ref[0] = (acc_ref[...] + bproj_ref[...]).astype(o_ref.dtype)


# ----------------------------------------------------------------------------
# One-time parameter preparation (hoisted out of the per-call wrapper):
# rpe gather, per-head fused weight splits, scale folding, bias folding, casts.
# Weight convention here is (in, out): y = x @ W + b.  (Real PyTorch nn.Linear
# checkpoints store (out, in) and must be transposed when loading.)
# ----------------------------------------------------------------------------
def prepare_attention_params(params, *, num_heads, input_size):
    wqkv = params["wqkv"]                                       # (C, 3C)
    bqkv = params["bqkv"]                                       # (3C,)
    C = wqkv.shape[0]
    D = C // num_heads
    N = input_size * input_size
    scale = D ** (-0.5)

    # Split into per-head q|k|v, fold scale into q, fuse to (H, C, 3D).
    w = wqkv.reshape(C, 3, num_heads, D)                        # (C, 3, H, D)
    wq = w[:, 0] * scale                                        # (C, H, D)
    wk = w[:, 1]
    wv = w[:, 2]
    wqkv_h = jnp.stack([wq, wk, wv], axis=2)                    # (C, H, 3, D)
    wqkv_h = wqkv_h.transpose(1, 0, 2, 3).reshape(num_heads, C, 3 * D)
    wqkv_h = wqkv_h.astype(jnp.bfloat16)

    b = bqkv.reshape(3, num_heads, D)
    bq = (b[0] * scale).reshape(num_heads, 1, D).astype(jnp.float32)
    bv = b[2]                                                   # (H, D)
    # bk is dropped: q . bk is constant along the softmax axis (cancels).

    # Relative position bias, gathered once: (H, N, N), stored bf16.
    rel_index = params["relative_position_index"].reshape(-1)   # (N*N,)
    bias = params["rpe_table"][rel_index].reshape(N, N, num_heads)
    bias = bias.transpose(2, 0, 1).astype(jnp.bfloat16)         # (H, N, N)

    # Per-head output projection slabs (H, D, C); fold attn@bv == bv into
    # bproj (softmax rows sum to 1, so this is exact up to the approx recip).
    wproj = params["wproj"].reshape(num_heads, D, C)
    bproj = params["bproj"] + jnp.einsum("hd,hdc->c", bv, wproj)
    wproj = wproj.astype(jnp.bfloat16)
    bproj = bproj.reshape(1, C).astype(jnp.float32)

    return dict(wqkv=wqkv_h, bq=bq, bias=bias, wproj=wproj, bproj=bproj)


# ----------------------------------------------------------------------------
# Wrapper: pallas_call with grid = (batch, heads); batch parallel, heads
# arbitrary (output + accumulator resident across the head axis).
# ----------------------------------------------------------------------------
def _pick_vmem_limit(resident_bytes):
    # Size from the actual per-step blocks (double-buffered pipeline) plus
    # headroom; cap lower on v7x (64 MiB physical VMEM), higher on v5e/v6e.
    try:
        kind = jax.devices()[0].device_kind.lower()
    except Exception:  # pragma: no cover - defensive
        kind = ""
    cap = (48 << 20) if "v7" in kind else (100 << 20)
    want = 2 * resident_bytes + (4 << 20)
    return int(min(max(want, 32 << 20), cap))


def hivit_attention(x, prepared, *, num_heads):
    B, N, C = x.shape
    D = C // num_heads
    kernel = functools.partial(_attention_kernel, head_dim=D)

    x_map = lambda b, h: (b, 0, 0)       # varies with batch only
    h_map = lambda b, h: (h, 0, 0)       # varies with head only

    resident_bytes = (
        N * C * 4 +              # x block (f32)
        C * 3 * D * 2 +          # fused qkv weight (bf16)
        D * 4 +                  # q bias
        N * N * 2 +              # rpe bias (bf16)
        D * C * 2 +              # proj slab (bf16)
        C * 4 +                  # proj bias
        N * C * x.dtype.itemsize +  # output block
        N * C * 4                # scratch accumulator
    )

    return pl.pallas_call(
        kernel,
        out_shape=jax.ShapeDtypeStruct((B, N, C), x.dtype),
        grid_spec=pltpu.PrefetchScalarGridSpec(
            num_scalar_prefetch=0,
            grid=(B, num_heads),
            in_specs=[
                pl.BlockSpec((1, N, C), x_map),                 # x
                pl.BlockSpec((1, C, 3 * D), h_map),             # fused qkv w
                pl.BlockSpec((1, 1, D), h_map),                 # q bias
                pl.BlockSpec((1, N, N), h_map),                 # rpe bias
                pl.BlockSpec((1, D, C), h_map),                 # proj slab
                pl.BlockSpec((1, C), lambda b, h: (0, 0)),      # proj bias
            ],
            out_specs=pl.BlockSpec((1, N, C), x_map),
            scratch_shapes=[pltpu.VMEM((N, C), jnp.float32)],
        ),
        compiler_params=pltpu.CompilerParams(
            dimension_semantics=("parallel", "arbitrary"),
            vmem_limit_bytes=_pick_vmem_limit(resident_bytes)),
    )(x, prepared["wqkv"], prepared["bq"], prepared["bias"],
      prepared["wproj"], prepared["bproj"])


# ----------------------------------------------------------------------------
# Parameter construction (deterministic, synthetic) + relative position index.
# ----------------------------------------------------------------------------
def make_relative_position_index(S):
    coords = np.stack(np.meshgrid(np.arange(S), np.arange(S), indexing="ij"))
    coords_flatten = coords.reshape(2, -1)                         # (2, N)
    rel = coords_flatten[:, :, None] - coords_flatten[:, None, :]  # (2, N, N)
    rel = rel.transpose(1, 2, 0).astype(np.int64)                  # (N, N, 2)
    rel[:, :, 0] += S - 1
    rel[:, :, 1] += S - 1
    rel[:, :, 0] *= 2 * S - 1
    return jnp.asarray(rel.sum(-1), dtype=jnp.int32)               # (N, N)


def make_params(key, input_size, dim, num_heads):
    k1, k2, k3, k4, k5 = jax.random.split(key, 5)
    table_len = (2 * input_size - 1) * (2 * input_size - 1)
    return {
        "rpe_table": 0.02 * jax.random.normal(k1, (table_len, num_heads),
                                              jnp.float32),
        "wqkv": 0.05 * jax.random.normal(k2, (dim, 3 * dim), jnp.float32),
        "bqkv": 0.05 * jax.random.normal(k3, (3 * dim,), jnp.float32),
        "wproj": 0.05 * jax.random.normal(k4, (dim, dim), jnp.float32),
        "bproj": 0.05 * jax.random.normal(k5, (dim,), jnp.float32),
        "relative_position_index": make_relative_position_index(input_size),
    }


# Pure-JAX f32 reference (mirrors the PyTorch forward with rpe on, no mask).
def reference_attention(x, params, *, num_heads, input_size):
    B, N, C = x.shape
    D = C // num_heads
    scale = D ** (-0.5)
    qkv = x @ params["wqkv"] + params["bqkv"]                      # (B, N, 3C)
    qkv = qkv.reshape(B, N, 3, num_heads, D).transpose(2, 0, 3, 1, 4)
    q, k, v = qkv[0] * scale, qkv[1], qkv[2]                       # (B, H, N, D)
    attn = jnp.einsum("bhnd,bhmd->bhnm", q, k)                     # (B, H, N, N)
    rel_index = params["relative_position_index"].reshape(-1)
    bias = params["rpe_table"][rel_index].reshape(N, N, num_heads)
    attn = attn + bias.transpose(2, 0, 1)[None]
    attn = jax.nn.softmax(attn, axis=-1)
    out = jnp.einsum("bhnm,bhmd->bhnd", attn, v)                   # (B, H, N, D)
    out = out.transpose(0, 2, 1, 3).reshape(B, N, C)
    return out @ params["wproj"] + params["bproj"]


if __name__ == "__main__":
    input_size = 4          # spatial side -> N = 16 tokens
    dim = 32                # channels
    num_heads = 4           # head_dim = 8
    B = 2
    N = input_size * input_size

    key = jax.random.PRNGKey(0)
    kx, kp = jax.random.split(key)
    x = jax.random.normal(kx, (B, N, dim), jnp.float32)
    params = make_params(kp, input_size, dim, num_heads)

    # One-time prep (scale/bias folding, per-head fused splits, rpe gather).
    prepared = prepare_attention_params(params, num_heads=num_heads,
                                        input_size=input_size)

    out = hivit_attention(x, prepared, num_heads=num_heads)
    out = jax.block_until_ready(out)

    ref = reference_attention(x, params, num_heads=num_heads,
                              input_size=input_size)
    # Tolerance loosened for bf16 matmul operands/bias storage + approx recip.
    np.testing.assert_allclose(np.asarray(out), np.asarray(ref),
                               rtol=2e-2, atol=2e-2)
    print("KERNEL_OK")
</pallas_src>

<mosaic_0001>
module attributes {stable_mosaic.version = 11 : i64} {
  func.func @_attention_kernel(%arg0: i32, %arg1: i32, %arg2: memref<1x16x32xf32, #tpu.memory_space<vmem>>, %arg3: memref<1x32x24xbf16, #tpu.memory_space<vmem>>, %arg4: memref<1x1x8xf32, #tpu.memory_space<vmem>>, %arg5: memref<1x16x16xbf16, #tpu.memory_space<vmem>>, %arg6: memref<1x8x32xbf16, #tpu.memory_space<vmem>>, %arg7: memref<1x32xf32, #tpu.memory_space<vmem>>, %arg8: memref<1x16x32xf32, #tpu.memory_space<vmem>>, %arg9: memref<16x32xf32, #tpu.memory_space<vmem>>) attributes {dimension_semantics = [#tpu.dimension_semantics<parallel>, #tpu.dimension_semantics<arbitrary>], iteration_bounds = array<i64: 2, 4>, scalar_prefetch = 0 : i64, scratch_operands = 1 : i64, tpu.core_type = #tpu.core_type<tc>, window_params = [{transform_indices = @transform_0, window_bounds = array<i64: 1, 16, 32>}, {transform_indices = @transform_1, window_bounds = array<i64: 1, 32, 24>}, {transform_indices = @transform_2, window_bounds = array<i64: 1, 1, 8>}, {transform_indices = @transform_3, window_bounds = array<i64: 1, 16, 16>}, {transform_indices = @transform_4, window_bounds = array<i64: 1, 8, 32>}, {pipeline_mode = #tpu.pipeline_mode<synchronous>, transform_indices = @transform_5, window_bounds = array<i64: 1, 32>}, {transform_indices = @transform_6, window_bounds = array<i64: 1, 16, 32>}]} {
    %c0_i32 = arith.constant 0 : i32
    %0 = arith.cmpi eq, %arg1, %c0_i32 : i32
    %1 = arith.extui %0 : i1 to i32
    %c0_i32_0 = arith.constant 0 : i32
    %2 = arith.cmpi ne, %1, %c0_i32_0 : i32
    scf.if %2 {
      %cst_25 = arith.constant 0.000000e+00 : f32
      %46 = vector.broadcast %cst_25 : f32 to vector<16x32xf32>
      %c0_26 = arith.constant 0 : index
      %c0_27 = arith.constant 0 : index
      %47 = vector.load %arg9[%c0_26, %c0_27] : memref<16x32xf32, #tpu.memory_space<vmem>>, vector<16x32xf32>
      tpu.vector_store %arg9[%c0_26, %c0_27], %46 {strides = array<i32>} : memref<16x32xf32, #tpu.memory_space<vmem>>, vector<16x32xf32>,
    } else {
    }
    %c0 = arith.constant 0 : index
    %c0_1 = arith.constant 0 : index
    %c0_2 = arith.constant 0 : index
    %3 = vector.load %arg2[%c0, %c0_1, %c0_2] : memref<1x16x32xf32, #tpu.memory_space<vmem>>, vector<1x16x32xf32>
    %4 = vector.shape_cast %3 : vector<1x16x32xf32> to vector<16x32xf32>
    %5 = arith.truncf %4 : vector<16x32xf32> to vector<16x32xbf16>
    %c0_3 = arith.constant 0 : index
    %c0_4 = arith.constant 0 : index
    %c0_5 = arith.constant 0 : index
    %6 = vector.load %arg3[%c0_3, %c0_4, %c0_5] : memref<1x32x24xbf16, #tpu.memory_space<vmem>>, vector<1x32x24xbf16>
    %7 = vector.shape_cast %6 : vector<1x32x24xbf16> to vector<32x24xbf16>
    %cst = arith.constant dense<0.000000e+00> : vector<16x24xf32>
    %8 = tpu.matmul %5, %7, %cst {dimension_numbers = #tpu.dot_dimension_numbers<[1], [0], [0], [1], [0, 0, 1, 1], [], []>} : vector<16x32xbf16>, vector<32x24xbf16>, vector<16x24xf32> -> vector<16x24xf32>
    %9 = vector.extract_strided_slice %8 {offsets = [0, 0], sizes = [16, 8], strides = [1, 1]} : vector<16x24xf32> to vector<16x8xf32>
    %c0_6 = arith.constant 0 : index
    %c0_7 = arith.constant 0 : index
    %c0_8 = arith.constant 0 : index
    %10 = vector.load %arg4[%c0_6, %c0_7, %c0_8] : memref<1x1x8xf32, #tpu.memory_space<vmem>>, vector<1x1x8xf32>
    %11 = vector.shape_cast %10 : vector<1x1x8xf32> to vector<1x8xf32>
    %12 = vector.broadcast %11 : vector<1x8xf32> to vector<16x8xf32>
    %13 = arith.addf %9, %12 : vector<16x8xf32>
    %14 = vector.extract_strided_slice %8 {offsets = [0, 8], sizes = [16, 8], strides = [1, 1]} : vector<16x24xf32> to vector<16x8xf32>
    %15 = vector.extract_strided_slice %8 {offsets = [0, 16], sizes = [16, 8], strides = [1, 1]} : vector<16x24xf32> to vector<16x8xf32>
    %16 = arith.truncf %13 : vector<16x8xf32> to vector<16x8xbf16>
    %17 = arith.truncf %14 : vector<16x8xf32> to vector<16x8xbf16>
    %cst_9 = arith.constant dense<0.000000e+00> : vector<16x16xf32>
    %18 = tpu.matmul %16, %17, %cst_9 {dimension_numbers = #tpu.dot_dimension_numbers<[1], [1], [0], [0], [0, 0, 1, 0], [], []>} : vector<16x8xbf16>, vector<16x8xbf16>, vector<16x16xf32> -> vector<16x16xf32>
    %c0_10 = arith.constant 0 : index
    %c0_11 = arith.constant 0 : index
    %c0_12 = arith.constant 0 : index
    %19 = vector.load %arg5[%c0_10, %c0_11, %c0_12] : memref<1x16x16xbf16, #tpu.memory_space<vmem>>, vector<1x16x16xbf16>
    %20 = vector.shape_cast %19 : vector<1x16x16xbf16> to vector<16x16xbf16>
    %21 = arith.extf %20 : vector<16x16xbf16> to vector<16x16xf32>
    %22 = arith.addf %18, %21 : vector<16x16xf32>
    %cst_13 = arith.constant dense<0xFF800000> : vector<16xf32>
    %23 = vector.multi_reduction <maximumf>, %22, %cst_13 [1] : vector<16x16xf32> to vector<16xf32>
    %24 = vector.shape_cast %23 : vector<16xf32> to vector<16x1xf32>
    %25 = vector.broadcast %24 : vector<16x1xf32> to vector<16x16xf32>
    %26 = arith.subf %22, %25 : vector<16x16xf32>
    %27 = math.exp %26 : vector<16x16xf32>
    %cst_14 = arith.constant dense<0.000000e+00> : vector<16xf32>
    %28 = vector.multi_reduction <add>, %27, %cst_14 [1] : vector<16x16xf32> to vector<16xf32>
    %29 = vector.shape_cast %28 : vector<16xf32> to vector<16x1xf32>
    %30 = tpu.reciprocal %29 {approx = true} : vector<16x1xf32> -> vector<16x1xf32>
    %31 = vector.broadcast %30 : vector<16x1xf32> to vector<16x16xf32>
    %32 = arith.mulf %27, %31 : vector<16x16xf32>
    %33 = arith.truncf %32 : vector<16x16xf32> to vector<16x16xbf16>
    %34 = arith.truncf %15 : vector<16x8xf32> to vector<16x8xbf16>
    %cst_15 = arith.constant dense<0.000000e+00> : vector<16x8xf32>
    %35 = tpu.matmul %33, %34, %cst_15 {dimension_numbers = #tpu.dot_dimension_numbers<[1], [0], [0], [1], [0, 0, 1, 1], [], []>} : vector<16x16xbf16>, vector<16x8xbf16>, vector<16x8xf32> -> vector<16x8xf32>
    %c0_16 = arith.constant 0 : index
    %c0_17 = arith.constant 0 : index
    %36 = vector.load %arg9[%c0_16, %c0_17] : memref<16x32xf32, #tpu.memory_space<vmem>>, vector<16x32xf32>
    %37 = arith.truncf %35 : vector<16x8xf32> to vector<16x8xbf16>
    %c0_18 = arith.constant 0 : index
    %c0_19 = arith.constant 0 : index
    %c0_20 = arith.constant 0 : index
    %38 = vector.load %arg6[%c0_18, %c0_19, %c0_20] : memref<1x8x32xbf16, #tpu.memory_space<vmem>>, vector<1x8x32xbf16>
    %39 = vector.shape_cast %38 : vector<1x8x32xbf16> to vector<8x32xbf16>
    %cst_21 = arith.constant dense<0.000000e+00> : vector<16x32xf32>
    %40 = tpu.matmul %37, %39, %cst_21 {dimension_numbers = #tpu.dot_dimension_numbers<[1], [0], [0], [1], [0, 0, 1, 1], [], []>} : vector<16x8xbf16>, vector<8x32xbf16>, vector<16x32xf32> -> vector<16x32xf32>
    %41 = arith.addf %36, %40 : vector<16x32xf32>
    %c0_22 = arith.constant 0 : index
    %c0_23 = arith.constant 0 : index
    %42 = vector.load %arg9[%c0_22, %c0_23] : memref<16x32xf32, #tpu.memory_space<vmem>>, vector<16x32xf32>
    tpu.vector_store %arg9[%c0_22, %c0_23], %41 {strides = array<i32>} : memref<16x32xf32, #tpu.memory_space<vmem>>, vector<16x32xf32>,
    %c3_i32 = arith.constant 3 : i32
    %43 = arith.cmpi eq, %arg1, %c3_i32 : i32
    %44 = arith.extui %43 : i1 to i32
    %c0_i32_24 = arith.constant 0 : i32
    %45 = arith.cmpi ne, %44, %c0_i32_24 : i32
    scf.if %45 {
      %c0_25 = arith.constant 0 : index
      %c0_26 = arith.constant 0 : index
      %46 = vector.load %arg9[%c0_25, %c0_26] : memref<16x32xf32, #tpu.memory_space<vmem>>, vector<16x32xf32>
      %c0_27 = arith.constant 0 : index
      %c0_28 = arith.constant 0 : index
      %47 = vector.load %arg7[%c0_27, %c0_28] : memref<1x32xf32, #tpu.memory_space<vmem>>, vector<1x32xf32>
      %48 = vector.broadcast %47 : vector<1x32xf32> to vector<16x32xf32>
      %49 = arith.addf %46, %48 : vector<16x32xf32>
      %c0_29 = arith.constant 0 : index
      %c0_30 = arith.constant 0 : index
      %c0_31 = arith.constant 0 : index
      %50 = vector.load %arg8[%c0_29, %c0_30, %c0_31] : memref<1x16x32xf32, #tpu.memory_space<vmem>>, vector<1x16x32xf32>
      %51 = vector.shape_cast %50 : vector<1x16x32xf32> to vector<16x32xf32>
      %52 = vector.shape_cast %49 : vector<16x32xf32> to vector<1x16x32xf32>
      tpu.vector_store %arg8[%c0_29, %c0_30, %c0_31], %52 {strides = array<i32>} : memref<1x16x32xf32, #tpu.memory_space<vmem>>, vector<1x16x32xf32>,
    } else {
    }
    return
  }
  func.func @transform_0(%arg0: i32, %arg1: i32) -> (i32, i32, i32) {
    %c0_i32 = arith.constant 0 : i32
    %c0_i32_0 = arith.constant 0 : i32
    %c0_i32_1 = arith.constant 0 : i32
    return %arg0, %c0_i32, %c0_i32_0 : i32, i32, i32
  }
  func.func @transform_1(%arg0: i32, %arg1: i32) -> (i32, i32, i32) {
    %c0_i32 = arith.constant 0 : i32
    %c0_i32_0 = arith.constant 0 : i32
    %c0_i32_1 = arith.constant 0 : i32
    return %arg1, %c0_i32, %c0_i32_0 : i32, i32, i32
  }
  func.func @transform_2(%arg0: i32, %arg1: i32) -> (i32, i32, i32) {
    %c0_i32 = arith.constant 0 : i32
    %c0_i32_0 = arith.constant 0 : i32
    %c0_i32_1 = arith.constant 0 : i32
    return %arg1, %c0_i32, %c0_i32_0 : i32, i32, i32
  }
  func.func @transform_3(%arg0: i32, %arg1: i32) -> (i32, i32, i32) {
    %c0_i32 = arith.constant 0 : i32
    %c0_i32_0 = arith.constant 0 : i32
    %c0_i32_1 = arith.constant 0 : i32
    return %arg1, %c0_i32, %c0_i32_0 : i32, i32, i32
  }
  func.func @transform_4(%arg0: i32, %arg1: i32) -> (i32, i32, i32) {
    %c0_i32 = arith.constant 0 : i32
    %c0_i32_0 = arith.constant 0 : i32
    %c0_i32_1 = arith.constant 0 : i32
    return %arg1, %c0_i32, %c0_i32_0 : i32, i32, i32
  }
  func.func @transform_5(%arg0: i32, %arg1: i32) -> (i32, i32) {
    %c0_i32 = arith.constant 0 : i32
    %c0_i32_0 = arith.constant 0 : i32
    %c0_i32_1 = arith.constant 0 : i32
    return %c0_i32, %c0_i32_0 : i32, i32
  }
  func.func @transform_6(%arg0: i32, %arg1: i32) -> (i32, i32, i32) {
    %c0_i32 = arith.constant 0 : i32
    %c0_i32_0 = arith.constant 0 : i32
    %c0_i32_1 = arith.constant 0 : i32
    return %arg0, %c0_i32, %c0_i32_0 : i32, i32, i32
  }
}

</mosaic_0001>

<llo_original>
// kernel: tpu_custom_call.1
$region0: #{tpu_custom_call.1}
  #allocation0 [shape = 'u32[]', space=smem, size = 0x4, offset = 0x4, fixed_abs, tag = 'smem constant byte address 0x4 - core index']
  #allocation1 [shape = 'u32[144,128]{1,0:T(1,128)}', space=vmem, size = 0x12000, scoped, tag = 'internal scratch']
  #allocation2 [shape = 'f32[16,32]{1,0:T(8,128)}', space=vmem, size = 0x2000, scoped, tag = 'scratch operand']
  %s0 = inlined_call_operand.vmem [shape: f32[2,16,32], index: 0, kind: input, shape index: {}]
  %s1 = inlined_call_operand.vmem [shape: bf16[4,32,24], index: 1, kind: input, shape index: {}]
  %s2 = inlined_call_operand.vmem [shape: f32[4,1,8], index: 2, kind: input, shape index: {}]
  %s3 = inlined_call_operand.vmem [shape: bf16[4,16,16], index: 3, kind: input, shape index: {}]
  %s4 = inlined_call_operand.vmem [shape: bf16[4,8,32], index: 4, kind: input, shape index: {}]
  %s5 = inlined_call_operand.vmem [shape: f32[1,32], index: 5, kind: input, shape index: {}]
  %s6 = inlined_call_operand.hbm [shape: f32[2,16,32], index: 6, kind: output, shape index: {}]
  %s7 = sld [smem:[#allocation0]]
  $region65: #{tpu_custom_call.1} parent=0
    _
  %s9 = ssub.s32 1, %s7
  %s10 = scalar_select 0, %s9, %s7
  $region1: #{tpu_custom_call.1} parent=0
    #allocation3 [shape = 'u8[16384]{0}', space=vmem, size = 0x4000, scoped, tag = 'output window, operand 0']
    #allocation4 [shape = 's32[2]{0}', space=sflag, size = 0x8, scoped, tag = 'scoped memory for tpu_custom_call.1']
    %11 = vsyncpa [#allocation4], 0
    %s12 = scalar_lea.sflag [#allocation4], 1
    %13 = vsyncpa %s12, 0
    loop: start=0, step=1, limit=10
    $region2: #{tpu_custom_call.1} parent=1 // loop_pre_header
      _
    $region3: #{tpu_custom_call.1} parent=1 // loop_header
      %s15 = sphi 0, %s19
      %p16 = scmp.ge.s32.totalorder %s15, 10
      %s22 = sphi 0, %s34
      %s23 = sphi 0, %s30
      %s24 = sphi 0, %s22
      %s25 = sphi 0, %s23
      %s26 = sphi 0, %s24
      %s27 = sphi 0, %s25
      %s37 = sphi 0, %s39
      %s40 = sphi 0, %s37
      %s41 = sphi 0, %s40
      %s57 = sphi 0, %s41
      %s63 = sphi 0, %s65
      %s66 = sphi 0, %s63
      %s67 = sphi 0, %s66
      %s83 = sphi 0, %s67
      %s89 = sphi 0, %s91
      %s92 = sphi 0, %s89
      %s93 = sphi 0, %s92
      %s109 = sphi 0, %s93
      %s115 = sphi 0, %s117
      %s118 = sphi 0, %s115
      %s119 = sphi 0, %s118
      %s135 = sphi 0, %s119
      %s141 = sphi 0, %s143
      %s144 = sphi 0, %s141
      %s145 = sphi 0, %s144
      %s161 = sphi 0, %s145
      %s165 = sphi 0, %s165
      %s167 = sphi 0, %s165
      %s168 = sphi 0, %s167
      %s182 = sphi 0, %s168
      %s188 = sphi 0, %s190
      %s191 = sphi 0, %s188
      %s192 = sphi 0, %s191
      %s208 = sphi 0, %s192
    $region4: #{tpu_custom_call.1} parent=1 // loop_header_branch
      %18 = sbr.rel (%p16) target = $region8
    $region5: #{tpu_custom_call.1} parent=1 // loop_body
      %s20 = ssub.s32 %s15, 1
      %s21 = ssub.s32 %s15, 2
      %s28 = sadd.s32 1, %s23
      %p29 = scmp.ge.s32.totalorder %s28, 4
      %s30 = scalar_select %p29, 0, %s28
      %s31 = sadd.s32 1, %s22
      %s32 = scalar_select %p29, %s31, %s22
      %p33 = scmp.ge.s32.totalorder %s32, 2
      %s34 = scalar_select %p33, 0, %s32
      %s35 = ssub.s32 %s22, %s34
      %p36 = scmp.eq.s32.totalorder %s35, 0
      %s38 = sadd.s32 %s37, 1
      %s39 = scalar_select %p36, %s37, %s38
      %p42 = pneg %p36
      %p43 = scmp.eq.s32.totalorder %s15, 7
      %p44 = por %p42, %p43
      %p45 = scmp.ne.s32.totalorder %s37, %s40
      %p46 = scmp.eq.s32.totalorder %s15, 0
      %p47 = por %p45, %p46
      %p48 = scmp.ne.s32.totalorder %s37, %s40
      %p49 = scmp.eq.s32.totalorder %s20, 7
      %p50 = por %p48, %p49
      %p51 = scmp.ne.s32.totalorder %s40, %s41
      %p52 = scmp.eq.s32.totalorder %s20, 0
      %p53 = por %p51, %p52
      %p54 = scmp.ne.s32.totalorder %s40, %s41
      %p55 = scmp.eq.s32.totalorder %s21, 7
      %p56 = por %p54, %p55
      %p58 = scmp.ne.s32.totalorder %s41, %s57
      %p59 = scmp.eq.s32.totalorder %s21, 0
      %p60 = por %p58, %p59
      %s61 = ssub.s32 %s23, %s30
      %p62 = scmp.eq.s32.totalorder %s61, 0
      %s64 = sadd.s32 %s63, 1
      %s65 = scalar_select %p62, %s63, %s64
      %p68 = pneg %p62
      %p69 = scmp.eq.s32.totalorder %s15, 7
      %p70 = por %p68, %p69
      %p71 = scmp.ne.s32.totalorder %s63, %s66
      %p72 = scmp.eq.s32.totalorder %s15, 0
      %p73 = por %p71, %p72
      %p74 = scmp.ne.s32.totalorder %s63, %s66
      %p75 = scmp.eq.s32.totalorder %s20, 7
      %p76 = por %p74, %p75
      %p77 = scmp.ne.s32.totalorder %s66, %s67
      %p78 = scmp.eq.s32.totalorder %s20, 0
      %p79 = por %p77, %p78
      %p80 = scmp.ne.s32.totalorder %s66, %s67
      %p81 = scmp.eq.s32.totalorder %s21, 7
      %p82 = por %p80, %p81
      %p84 = scmp.ne.s32.totalorder %s67, %s83
      %p85 = scmp.eq.s32.totalorder %s21, 0
      %p86 = por %p84, %p85
      %s87 = ssub.s32 %s23, %s30
      %p88 = scmp.eq.s32.totalorder %s87, 0
      %s90 = sadd.s32 %s89, 1
      %s91 = scalar_select %p88, %s89, %s90
      %p94 = pneg %p88
      %p95 = scmp.eq.s32.totalorder %s15, 7
      %p96 = por %p94, %p95
      %p97 = scmp.ne.s32.totalorder %s89, %s92
      %p98 = scmp.eq.s32.totalorder %s15, 0
      %p99 = por %p97, %p98
      %p100 = scmp.ne.s32.totalorder %s89, %s92
      %p101 = scmp.eq.s32.totalorder %s20, 7
      %p102 = por %p100, %p101
      %p103 = scmp.ne.s32.totalorder %s92, %s93
      %p104 = scmp.eq.s32.totalorder %s20, 0
      %p105 = por %p103, %p104
      %p106 = scmp.ne.s32.totalorder %s92, %s93
      %p107 = scmp.eq.s32.totalorder %s21, 7
      %p108 = por %p106, %p107
      %p110 = scmp.ne.s32.totalorder %s93, %s109
      %p111 = scmp.eq.s32.totalorder %s21, 0
      %p112 = por %p110, %p111
      %s113 = ssub.s32 %s23, %s30
      %p114 = scmp.eq.s32.totalorder %s113, 0
      %s116 = sadd.s32 %s115, 1
      %s117 = scalar_select %p114, %s115, %s116
      %p120 = pneg %p114
      %p121 = scmp.eq.s32.totalorder %s15, 7
      %p122 = por %p120, %p121
      %p123 = scmp.ne.s32.totalorder %s115, %s118
      %p124 = scmp.eq.s32.totalorder %s15, 0
      %p125 = por %p123, %p124
      %p126 = scmp.ne.s32.totalorder %s115, %s118
      %p127 = scmp.eq.s32.totalorder %s20, 7
      %p128 = por %p126, %p127
      %p129 = scmp.ne.s32.totalorder %s118, %s119
      %p130 = scmp.eq.s32.totalorder %s20, 0
      %p131 = por %p129, %p130
      %p132 = scmp.ne.s32.totalorder %s118, %s119
      %p133 = scmp.eq.s32.totalorder %s21, 7
      %p134 = por %p132, %p133
      %p136 = scmp.ne.s32.totalorder %s119, %s135
      %p137 = scmp.eq.s32.totalorder %s21, 0
      %p138 = por %p136, %p137
      %s139 = ssub.s32 %s23, %s30
      %p140 = scmp.eq.s32.totalorder %s139, 0
      %s142 = sadd.s32 %s141, 1
      %s143 = scalar_select %p140, %s141, %s142
      %p146 = pneg %p140
      %p147 = scmp.eq.s32.totalorder %s15, 7
      %p148 = por %p146, %p147
      %p149 = scmp.ne.s32.totalorder %s141, %s144
      %p150 = scmp.eq.s32.totalorder %s15, 0
      %p151 = por %p149, %p150
      %p152 = scmp.ne.s32.totalorder %s141, %s144
      %p153 = scmp.eq.s32.totalorder %s20, 7
      %p154 = por %p152, %p153
      %p155 = scmp.ne.s32.totalorder %s144, %s145
      %p156 = scmp.eq.s32.totalorder %s20, 0
      %p157 = por %p155, %p156
      %p158 = scmp.ne.s32.totalorder %s144, %s145
      %p159 = scmp.eq.s32.totalorder %s21, 7
      %p160 = por %p158, %p159
      %p162 = scmp.ne.s32.totalorder %s145, %s161
      %p163 = scmp.eq.s32.totalorder %s21, 0
      %p164 = por %p162, %p163
      %s166 = sadd.s32 %s165, 1
      %p169 = scmp.eq.s32.totalorder %s15, 7
      %p170 = scmp.ne.s32.totalorder %s165, %s167
      %p171 = scmp.eq.s32.totalorder %s15, 0
      %p172 = por %p170, %p171
      %p173 = scmp.ne.s32.totalorder %s165, %s167
      %p174 = scmp.eq.s32.totalorder %s20, 7
      %p175 = por %p173, %p174
      %p176 = scmp.ne.s32.totalorder %s167, %s168
      %p177 = scmp.eq.s32.totalorder %s20, 0
      %p178 = por %p176, %p177
      %p179 = scmp.ne.s32.totalorder %s167, %s168
      %p180 = scmp.eq.s32.totalorder %s21, 7
      %p181 = por %p179, %p180
      %p183 = scmp.ne.s32.totalorder %s168, %s182
      %p184 = scmp.eq.s32.totalorder %s21, 0
      %p185 = por %p183, %p184
      %s186 = ssub.s32 %s22, %s34
      %p187 = scmp.eq.s32.totalorder %s186, 0
      %s189 = sadd.s32 %s188, 1
      %s190 = scalar_select %p187, %s188, %s189
      %p193 = pneg %p187
      %p194 = scmp.eq.s32.totalorder %s15, 7
      %p195 = por %p193, %p194
      %p196 = scmp.ne.s32.totalorder %s188, %s191
      %p197 = scmp.eq.s32.totalorder %s15, 0
      %p198 = por %p196, %p197
      %p199 = scmp.ne.s32.totalorder %s188, %s191
      %p200 = scmp.eq.s32.totalorder %s20, 7
      %p201 = por %p199, %p200
      %p202 = scmp.ne.s32.totalorder %s191, %s192
      %p203 = scmp.eq.s32.totalorder %s20, 0
      %p204 = por %p202, %p203
      %p205 = scmp.ne.s32.totalorder %s191, %s192
      %p206 = scmp.eq.s32.totalorder %s21, 7
      %p207 = por %p205, %p206
      %p209 = scmp.ne.s32.totalorder %s192, %s208
      %p210 = scmp.eq.s32.totalorder %s21, 0
      %p211 = por %p209, %p210
      %p212 = scmp.le.s32.totalorder 1, %s15
      %p213 = scmp.lt.s32.totalorder %s15, 9
      %p214 = pnand %p212, %p213
      %p215 = pneg %p214
      // Predicated region
      $region9: #{tpu_custom_call.1} parent=5 // pred_check
        _
      $region10: #{tpu_custom_call.1} parent=5 // pred_check_branch
        %217 = sbr.rel (%p214) target = $region12
      $region11: #{tpu_custom_call.1} parent=5 // pred_region
        %s218 = ssub.s32 %s15, 1
        // Predicated region
        $region13: #{tpu_custom_call.1} parent=11 // pred_check
          %p219 = pneg %p178
        $region14: #{tpu_custom_call.1} parent=11 // pred_check_branch
          %221 = sbr.rel (%p219) target = $region16
        $region15: #{tpu_custom_call.1} parent=11 // pred_region
          _
        $region16: #{tpu_custom_call.1} parent=11 // pred_fallthru
          _
      $region12: #{tpu_custom_call.1} parent=5 // pred_fallthru
        _
      %p222 = scmp.lt.s32.totalorder %s15, 8
      // Predicated region
      $region17: #{tpu_custom_call.1} parent=5 // pred_check
        %p223 = pneg %p222
      $region18: #{tpu_custom_call.1} parent=5 // pred_check_branch
        %225 = sbr.rel (%p223) target = $region20
      $region19: #{tpu_custom_call.1} parent=5 // pred_region
        // Predicated region
        $region21: #{tpu_custom_call.1} parent=19 // pred_check
          %p226 = pneg %p47
        $region22: #{tpu_custom_call.1} parent=19 // pred_check_branch
          %228 = sbr.rel (%p226) target = $region24
        $region23: #{tpu_custom_call.1} parent=19 // pred_region
          %p229 = scmp.lt.s32.totalorder %s22, 1
          %s230 = scalar_select %p229, %s22, 1
          %s231 = smul.addr %s230, 2
          %s232 = smul.addr %s231, 8
          %s233 = scalar_lea.vmem %s0, %s232
        $region24: #{tpu_custom_call.1} parent=19 // pred_fallthru
          _
        // Predicated region
        $region25: #{tpu_custom_call.1} parent=19 // pred_check
          %p234 = pneg %p73
        $region26: #{tpu_custom_call.1} parent=19 // pred_check_branch
          %236 = sbr.rel (%p234) target = $region28
        $region27: #{tpu_custom_call.1} parent=19 // pred_region
          %p237 = scmp.lt.s32.totalorder %s23, 3
          %s238 = scalar_select %p237, %s23, 3
          %s239 = smul.addr %s238, 4
          %s240 = smul.addr %s239, 4
          %s241 = scalar_lea.vmem %s1, %s240
        $region28: #{tpu_custom_call.1} parent=19 // pred_fallthru
          _
        // Predicated region
        $region29: #{tpu_custom_call.1} parent=19 // pred_check
          %p242 = pneg %p99
        $region30: #{tpu_custom_call.1} parent=19 // pred_check_branch
          %244 = sbr.rel (%p242) target = $region32
        $region31: #{tpu_custom_call.1} parent=19 // pred_region
          %p245 = scmp.lt.s32.totalorder %s23, 3
          %s246 = scalar_select %p245, %s23, 3
          %s247 = scalar_lea.vmem %s2, %s246
        $region32: #{tpu_custom_call.1} parent=19 // pred_fallthru
          _
        // Predicated region
        $region33: #{tpu_custom_call.1} parent=19 // pred_check
          %p248 = pneg %p125
        $region34: #{tpu_custom_call.1} parent=19 // pred_check_branch
          %250 = sbr.rel (%p248) target = $region36
        $region35: #{tpu_custom_call.1} parent=19 // pred_region
          %p251 = scmp.lt.s32.totalorder %s23, 3
          %s252 = scalar_select %p251, %s23, 3
          %s253 = smul.addr %s252, 2
          %s254 = smul.addr %s253, 4
          %s255 = scalar_lea.vmem %s3, %s254
        $region36: #{tpu_custom_call.1} parent=19 // pred_fallthru
          _
        // Predicated region
        $region37: #{tpu_custom_call.1} parent=19 // pred_check
          %p256 = pneg %p151
        $region38: #{tpu_custom_call.1} parent=19 // pred_check_branch
          %258 = sbr.rel (%p256) target = $region40
        $region39: #{tpu_custom_call.1} parent=19 // pred_region
          %p259 = scmp.lt.s32.totalorder %s23, 3
          %s260 = scalar_select %p259, %s23, 3
          %s261 = smul.addr %s260, 4
          %s262 = scalar_lea.vmem %s4, %s261
        $region40: #{tpu_custom_call.1} parent=19 // pred_fallthru
          _
      $region20: #{tpu_custom_call.1} parent=5 // pred_fallthru
        _
      %p263 = scmp.le.s32.totalorder 1, %s15
      %p264 = scmp.lt.s32.totalorder %s15, 9
      %p265 = pnand %p263, %p264
      %p266 = pneg %p265
      // Predicated region
      $region41: #{tpu_custom_call.1} parent=5 // pred_check
        _
      $region42: #{tpu_custom_call.1} parent=5 // pred_check_branch
        %268 = sbr.rel (%p265) target = $region44
      $region43: #{tpu_custom_call.1} parent=5 // pred_region
        %s269 = ssub.s32 %s15, 1
        %p270 = scmp.lt.s32.totalorder %s24, 1
        %s271 = scalar_select %p270, %s24, 1
        %s272 = smul.addr %s271, 2
        %s273 = smul.addr %s272, 8
        %s274 = scalar_lea.vmem %s0, %s273
        %p275 = pneg %p53
        %p276 = pneg %p50
        %p277 = scmp.lt.s32.totalorder %s25, 3
        %s278 = scalar_select %p277, %s25, 3
        %s279 = smul.addr %s278, 4
        %s280 = smul.addr %s279, 4
        %s281 = scalar_lea.vmem %s1, %s280
        %p282 = pneg %p79
        %p283 = pneg %p76
        %p284 = scmp.lt.s32.totalorder %s25, 3
        %s285 = scalar_select %p284, %s25, 3
        %s286 = scalar_lea.vmem %s2, %s285
        %p287 = pneg %p105
        %p288 = pneg %p102
        %p289 = scmp.lt.s32.totalorder %s25, 3
        %s290 = scalar_select %p289, %s25, 3
        %s291 = smul.addr %s290, 2
        %s292 = smul.addr %s291, 4
        %s293 = scalar_lea.vmem %s3, %s292
        %p294 = pneg %p131
        %p295 = pneg %p128
        %p296 = scmp.lt.s32.totalorder %s25, 3
        %s297 = scalar_select %p296, %s25, 3
        %s298 = smul.addr %s297, 4
        %s299 = scalar_lea.vmem %s4, %s298
        %p300 = pneg %p157
        %p301 = pneg %p154
        %p302 = pneg %p178
        %p303 = pneg %p175
        %p304 = pneg %p204
        %p305 = pneg %p201
        %s306 = sand.u32 %s191, 1
        %s307 = scalar_lea.sflag [#allocation4], %s306
        %s308 = sand.u32 %s191, 1
        %s309 = smul.addr %s308, 16
        %s310 = scalar_lea.vmem [#allocation3], %s309
        %p311 = scmp.lt.s32.totalorder %s24, 1
        %s312 = scalar_select %p311, %s24, 1
        %s313 = smul.addr %s312, 2
        %s314 = smul.addr %s313, 8
        %s315 = scalar_lea.vmem %s0, %s314
        %p316 = scmp.lt.s32.totalorder %s25, 3
        %s317 = scalar_select %p316, %s25, 3
        %s318 = smul.addr %s317, 4
        %s319 = smul.addr %s318, 4
        %s320 = scalar_lea.vmem %s1, %s319
        %p321 = scmp.lt.s32.totalorder %s25, 3
        %s322 = scalar_select %p321, %s25, 3
        %s323 = scalar_lea.vmem %s2, %s322
        %p324 = scmp.lt.s32.totalorder %s25, 3
        %s325 = scalar_select %p324, %s25, 3
        %s326 = smul.addr %s325, 2
        %s327 = smul.addr %s326, 4
        %s328 = scalar_lea.vmem %s3, %s327
        %p329 = scmp.lt.s32.totalorder %s25, 3
        %s330 = scalar_select %p329, %s25, 3
        %s331 = smul.addr %s330, 4
        %s332 = scalar_lea.vmem %s4, %s331
        %p334 = scmp.eq.s32.totalorder %s25, 0
        // Predicated region
        $region45: #{tpu_custom_call.1} parent=43 // pred_check
          %p335 = pneg %p334
        $region46: #{tpu_custom_call.1} parent=43 // pred_check_branch
          %337 = sbr.rel (%p335) target = $region48
        $region47: #{tpu_custom_call.1} parent=43 // pred_region
          %vm338 = vcmask 261120
          %339 = vst.msk [vmem:[#allocation2] sm:$0xff] %vm338, 0.0
          %340 = vst.msk [vmem:[#allocation2 + $0x8] sm:$0xff] %vm338, 0.0
        $region48: #{tpu_custom_call.1} parent=43 // pred_fallthru
          _
        %v341 = vld [vmem:[%s315] sm:$0xff]
        %v342 = vld [vmem:[%s315 + $0x8] sm:$0xff]
        %v343 = vpack.c.bf16 %v342, %v341
        %v344 = vld [vmem:[%s320] sm:$0xf]
        %v345 = vld [vmem:[%s320 + $0x4] sm:$0xf]
        %v346 = vld [vmem:[%s320 + $0x8] sm:$0xf]
        %v347 = vld [vmem:[%s320 + $0xc] sm:$0xf]
        %v352 = vunpack.c.l.b16 %v344
        %v353 = vunpack.c.l.b16 %v345
        %v354 = vunpack.c.l.b16 %v346
        %v355 = vunpack.c.l.b16 %v347
        %v356 = vpack.c.b16 %v353, %v352
        %v357 = vpack.c.b16 %v355, %v354
        %vm360 = vcmask 261120
        %v362 = vsel %vm360, %v343, 0
        %364 = vmatprep.subr.bf16.mxu0 0
        %365 = vmatpush1.bf16.msra.mxu0 %v356
        %366 = vmatprep.subr.bf16.mxu0 0
        %367 = vmatpush1.bf16.msra.mxu0 %v357
        %368 = vmatprep.subr.bf16.mxu0 0
        %369 = vmatpush1.bf16.msra.mxu0 0
        %370 = vmatprep.subr.bf16.mxu0 0
        %371 = vmatpush1.bf16.msra.mxu0 0
        %372 = vmatprep.subr.bf16.mxu0 0
        %373 = vmatpush1.bf16.msra.mxu0 0
        %374 = vmatprep.subr.bf16.mxu0 0
        %375 = vmatpush1.bf16.msra.mxu0 0
        %376 = vmatprep.subr.bf16.mxu0 0
        %377 = vmatpush1.bf16.msra.mxu0 0
        %378 = vmatprep.subr.bf16.mxu0 0
        %379 = vmatpush1.bf16.msra.mxu0 0
        %380 = vmatprep.subr.bf16.mxu0 0
        %381 = vmatpush1.bf16.msra.mxu0 0
        %382 = vmatprep.subr.bf16.mxu0 0
        %383 = vmatpush1.bf16.msra.mxu0 0
        %384 = vmatprep.subr.bf16.mxu0 0
        %385 = vmatpush1.bf16.msra.mxu0 0
        %386 = vmatprep.subr.bf16.mxu0 0
        %387 = vmatpush1.bf16.msra.mxu0 0
        %388 = vmatprep.subr.bf16.mxu0 0
        %389 = vmatpush1.bf16.msra.mxu0 0
        %390 = vmatprep.subr.bf16.mxu0 0
        %391 = vmatpush1.bf16.msra.mxu0 0
        %392 = vmatprep.subr.bf16.mxu0 0
        %393 = vmatpush1.bf16.msra.mxu0 0
        %394 = vmatprep.subr.bf16.mxu0 0
        %395 = vmatpush1.bf16.msra.mxu0 0
        %396 = vmatprep.mubr.bf16.mxu0 0
        %397 = vmatmul.mubr.bf16.gmra.mrb[0].mxu0 %v362
        %v398 = vpop.f32.mrb[0].mxu0
        %v399 = vadd.f32 0.0, %v398
        %v400 = vpop.f32.mrb[0].mxu0
        %v401 = vpop.f32.mrb[0].mxu0
        %v402 = vadd.f32 0.0, %v401
        %v403 = vpop.f32.mrb[0].mxu0
        %404 = vdwg.mxu0
        %v405 = vld [vmem:[%s323] sm:$0x1]
        %v407 = vlaneseq
        %v408 = vshrl.u32 %v407, 7
        %v409 = vsub.s32 0, %v408
        %v410 = vrot.slane %v405, %v409
        %v412 = vadd.f32 %v399, %v410
        %v413 = vadd.f32 %v402, %v410
        %v414 = vpack.c.bf16 %v413, %v412
        %v415 = vpack.c.bf16 %v402, %v399
        %v416 = vld [vmem:[%s328] sm:$0xf]
        %v417 = vld [vmem:[%s328 + $0x4] sm:$0xf]
        %v418 = vunpack.c.l.bf16 %v416
        %v419 = vunpack.c.l.bf16 %v417
        %421 = vrot.lane.b32.xlu0 %v415, 120
        %v422 = vpop.permute.xlu0 %421
        %vm423 = vcmask 64512
        %v425 = vsel %vm423, %v414, 0
        %v428 = vsel %vm423, %v422, 0
        %430 = vmatprep.subr.bf16.mxu0 0
        %431 = vmatpush1.bf16.xpose.msra.mxu0 %v428
        %432 = vmatprep.subr.bf16.mxu0 0
        %433 = vmatpush1.bf16.xpose.msra.mxu0 0
        %434 = vmatprep.subr.bf16.mxu0 0
        %435 = vmatpush1.bf16.xpose.msra.mxu0 0
        %436 = vmatprep.subr.bf16.mxu0 0
        %437 = vmatpush1.bf16.xpose.msra.mxu0 0
        %438 = vmatprep.subr.bf16.mxu0 0
        %439 = vmatpush1.bf16.xpose.msra.mxu0 0
        %440 = vmatprep.subr.bf16.mxu0 0
        %441 = vmatpush1.bf16.xpose.msra.mxu0 0
        %442 = vmatprep.subr.bf16.mxu0 0
        %443 = vmatpush1.bf16.xpose.msra.mxu0 0
        %444 = vmatprep.subr.bf16.mxu0 0
        %445 = vmatpush1.bf16.xpose.msra.mxu0 0
        %446 = vmatprep.subr.bf16.mxu0 0
        %447 = vmatpush1.bf16.xpose.msra.mxu0 0
        %448 = vmatprep.subr.bf16.mxu0 0
        %449 = vmatpush1.bf16.xpose.msra.mxu0 0
        %450 = vmatprep.subr.bf16.mxu0 0
        %451 = vmatpush1.bf16.xpose.msra.mxu0 0
        %452 = vmatprep.subr.bf16.mxu0 0
        %453 = vmatpush1.bf16.xpose.msra.mxu0 0
        %454 = vmatprep.subr.bf16.mxu0 0
        %455 = vmatpush1.bf16.xpose.msra.mxu0 0
        %456 = vmatprep.subr.bf16.mxu0 0
        %457 = vmatpush1.bf16.xpose.msra.mxu0 0
        %458 = vmatprep.subr.bf16.mxu0 0
        %459 = vmatpush1.bf16.xpose.msra.mxu0 0
        %460 = vmatprep.subr.bf16.mxu0 0
        %461 = vmatpush1.bf16.xpose.msra.mxu0 0
        %462 = vmatprep.mubr.bf16.mxu0 0
        %463 = vmatmul.mubr.bf16.gmra.mrb[0].mxu0 %v425
        %v464 = vpop.f32.mrb[0].mxu0
        %v465 = vadd.f32 %v418, %v464
        %v466 = vpop.f32.mrb[0].mxu0
        %v467 = vpop.f32.mrb[0].mxu0
        %v468 = vadd.f32 %v419, %v467
        %v469 = vpop.f32.mrb[0].mxu0
        %470 = vdwg.mxu0
        %vm471 = vcmask 130048
        %v472 = vsel %vm471, %v465, -inf
        %473 = vmax.xlane.f32.xlu0 %v472
        %v474 = vpop.xlane.xlu0 %473
        %v475 = vsel %vm471, %v468, -inf
        %476 = vmax.xlane.f32.xlu0 %v475
        %v477 = vpop.xlane.xlu0 %476
        %v478 = vsub.f32 %v465, %v474
        %v479 = vsub.f32 %v468, %v477
        %v480 = vmul.f32 %v478, 1.442695
        %v481 = vpow.pop %v480
        %v482 = vmul.f32 %v479, 1.442695
        %v483 = vpow.pop %v482
        %v484 = vsel %vm471, %v481, 0.0
        %485 = vadd.xlane.f32.xlu0 %v484
        %v486 = vpop.xlane.xlu0 %485
        %v487 = vsel %vm471, %v483, 0.0
        %488 = vadd.xlane.f32.xlu0 %v487
        %v489 = vpop.xlane.xlu0 %488
        %v490 = vrcp.pop %v486
        %v491 = vrcp.pop %v489
        %v492 = vmul.f32 %v481, %v490
        %v493 = vmul.f32 %v483, %v491
        %v494 = vpack.c.bf16 %v493, %v492
        %495 = vrot.lane.b32.xlu0 %v415, 112
        %v496 = vpop.permute.xlu0 %495
        %v499 = vsel %vm471, %v494, 0
        %501 = vmatprep.subr.bf16.mxu0 0
        %502 = vmatpush1.bf16.msra.mxu0 %v496
        %503 = vmatprep.subr.bf16.mxu0 0
        %504 = vmatpush1.bf16.msra.mxu0 0
        %505 = vmatprep.subr.bf16.mxu0 0
        %506 = vmatpush1.bf16.msra.mxu0 0
        %507 = vmatprep.subr.bf16.mxu0 0
        %508 = vmatpush1.bf16.msra.mxu0 0
        %509 = vmatprep.subr.bf16.mxu0 0
        %510 = vmatpush1.bf16.msra.mxu0 0
        %511 = vmatprep.subr.bf16.mxu0 0
        %512 = vmatpush1.bf16.msra.mxu0 0
        %513 = vmatprep.subr.bf16.mxu0 0
        %514 = vmatpush1.bf16.msra.mxu0 0
        %515 = vmatprep.subr.bf16.mxu0 0
        %516 = vmatpush1.bf16.msra.mxu0 0
        %517 = vmatprep.subr.bf16.mxu0 0
        %518 = vmatpush1.bf16.msra.mxu0 0
        %519 = vmatprep.subr.bf16.mxu0 0
        %520 = vmatpush1.bf16.msra.mxu0 0
        %521 = vmatprep.subr.bf16.mxu0 0
        %522 = vmatpush1.bf16.msra.mxu0 0
        %523 = vmatprep.subr.bf16.mxu0 0
        %524 = vmatpush1.bf16.msra.mxu0 0
        %525 = vmatprep.subr.bf16.mxu0 0
        %526 = vmatpush1.bf16.msra.mxu0 0
        %527 = vmatprep.subr.bf16.mxu0 0
        %528 = vmatpush1.bf16.msra.mxu0 0
        %529 = vmatprep.subr.bf16.mxu0 0
        %530 = vmatpush1.bf16.msra.mxu0 0
        %531 = vmatprep.subr.bf16.mxu0 0
        %532 = vmatpush1.bf16.msra.mxu0 0
        %533 = vmatprep.mubr.bf16.mxu0 0
        %534 = vmatmul.mubr.bf16.gmra.mrb[0].mxu0 %v499
        %v535 = vpop.f32.mrb[0].mxu0
        %v536 = vadd.f32 0.0, %v535
        %v537 = vpop.f32.mrb[0].mxu0
        %v538 = vpop.f32.mrb[0].mxu0
        %v539 = vadd.f32 0.0, %v538
        %v540 = vpop.f32.mrb[0].mxu0
        %541 = vdwg.mxu0
        %v542 = vld [vmem:[#allocation2] sm:$0xff]
        %v543 = vld [vmem:[#allocation2 + $0x8] sm:$0xff]
        %v544 = vpack.c.bf16 %v539, %v536
        %v545 = vld [vmem:[%s332] sm:$0xf]
        %v547 = vsel %vm423, %v544, 0
        %vm549 = vcmask 1043456
        %v551 = vsel %vm549, %v545, 0
        %553 = vmatprep.subr.bf16.mxu0 0
        %554 = vmatpush1.bf16.msra.mxu0 %v551
        %555 = vmatprep.subr.bf16.mxu0 0
        %556 = vmatpush1.bf16.msra.mxu0 0
        %557 = vmatprep.subr.bf16.mxu0 0
        %558 = vmatpush1.bf16.msra.mxu0 0
        %559 = vmatprep.subr.bf16.mxu0 0
        %560 = vmatpush1.bf16.msra.mxu0 0
        %561 = vmatprep.subr.bf16.mxu0 0
        %562 = vmatpush1.bf16.msra.mxu0 0
        %563 = vmatprep.subr.bf16.mxu0 0
        %564 = vmatpush1.bf16.msra.mxu0 0
        %565 = vmatprep.subr.bf16.mxu0 0
        %566 = vmatpush1.bf16.msra.mxu0 0
        %567 = vmatprep.subr.bf16.mxu0 0
        %568 = vmatpush1.bf16.msra.mxu0 0
        %569 = vmatprep.subr.bf16.mxu0 0
        %570 = vmatpush1.bf16.msra.mxu0 0
        %571 = vmatprep.subr.bf16.mxu0 0
        %572 = vmatpush1.bf16.msra.mxu0 0
        %573 = vmatprep.subr.bf16.mxu0 0
        %574 = vmatpush1.bf16.msra.mxu0 0
        %575 = vmatprep.subr.bf16.mxu0 0
        %576 = vmatpush1.bf16.msra.mxu0 0
        %577 = vmatprep.subr.bf16.mxu0 0
        %578 = vmatpush1.bf16.msra.mxu0 0
        %579 = vmatprep.subr.bf16.mxu0 0
        %580 = vmatpush1.bf16.msra.mxu0 0
        %581 = vmatprep.subr.bf16.mxu0 0
        %582 = vmatpush1.bf16.msra.mxu0 0
        %583 = vmatprep.subr.bf16.mxu0 0
        %584 = vmatpush1.bf16.msra.mxu0 0
        %585 = vmatprep.mubr.bf16.mxu0 0
        %586 = vmatmul.mubr.bf16.gmra.mrb[0].mxu0 %v547
        %v587 = vpop.f32.mrb[0].mxu0
        %v588 = vadd.f32 0.0, %v587
        %v589 = vpop.f32.mrb[0].mxu0
        %v590 = vpop.f32.mrb[0].mxu0
        %v591 = vadd.f32 0.0, %v590
        %v592 = vpop.f32.mrb[0].mxu0
        %593 = vdwg.mxu0
        %v594 = vadd.f32 %v542, %v588
        %v595 = vadd.f32 %v543, %v591
        %596 = vst.msk [vmem:[#allocation2] sm:$0xff] %vm360, %v594
        %597 = vst.msk [vmem:[#allocation2 + $0x8] sm:$0xff] %vm360, %v595
        %p598 = scmp.eq.s32.totalorder %s25, 3
        // Predicated region
        $region49: #{tpu_custom_call.1} parent=43 // pred_check
          %p599 = pneg %p598
        $region50: #{tpu_custom_call.1} parent=43 // pred_check_branch
          %601 = sbr.rel (%p599) target = $region52
        $region51: #{tpu_custom_call.1} parent=43 // pred_region
          %v602 = vld [vmem:[#allocation2] sm:$0xff]
          %v603 = vld [vmem:[#allocation2 + $0x8] sm:$0xff]
          %v604 = vld [vmem:[%s5] sm:$0x1]
          %v606 = vlaneseq
          %v607 = vshrl.u32 %v606, 7
          %v608 = vsub.s32 0, %v607
          %v609 = vrot.slane %v604, %v608
          %v611 = vadd.f32 %v602, %v609
          %v612 = vadd.f32 %v603, %v609
          %613 = vst.msk [vmem:[%s310] sm:$0xff] %vm360, %v611
          %614 = vst.msk [vmem:[%s310 + $0x8] sm:$0xff] %vm360, %v612
        $region52: #{tpu_custom_call.1} parent=43 // pred_fallthru
          _
        %s615 = sand.u32 %s191, 1
        %s616 = scalar_lea.sflag [#allocation4], %s615
        %s617 = sand.u32 %s191, 1
        %s618 = smul.addr %s617, 16
        %s619 = scalar_lea.vmem [#allocation3], %s618
        // Predicated region
        $region53: #{tpu_custom_call.1} parent=43 // pred_check
          %p620 = pneg %p201
        $region54: #{tpu_custom_call.1} parent=43 // pred_check_branch
          %622 = sbr.rel (%p620) target = $region56
        $region55: #{tpu_custom_call.1} parent=43 // pred_region
          %s624 = ssub.s32 256, 256
          %625 = vsyncadd %s616, %s624
          %s626 = smul.addr %s24, 2
          %s627 = smul.addr %s626, 128
          %s628 = scalar_lea.hbm %s6, %s627
          %s629 = sshll.u32 %s619, 4
          %s630 = int_to_ptr.vmem [resolvable:$true] %s629
          %635 = dma.vmem_to_hbm [thread:$0]  %s630, 256, %s628, %s616, 128, 128, 8
        $region56: #{tpu_custom_call.1} parent=43 // pred_fallthru
          _
      $region44: #{tpu_custom_call.1} parent=5 // pred_fallthru
        _
      %p636 = scmp.le.s32.totalorder 2, %s15
      // Predicated region
      $region57: #{tpu_custom_call.1} parent=5 // pred_check
        %p637 = pneg %p636
      $region58: #{tpu_custom_call.1} parent=5 // pred_check_branch
        %639 = sbr.rel (%p637) target = $region60
      $region59: #{tpu_custom_call.1} parent=5 // pred_region
        %s640 = ssub.s32 %s15, 2
        // Predicated region
        $region61: #{tpu_custom_call.1} parent=59 // pred_check
          %p641 = pneg %p207
        $region62: #{tpu_custom_call.1} parent=59 // pred_check_branch
          %643 = sbr.rel (%p641) target = $region64
        $region63: #{tpu_custom_call.1} parent=59 // pred_region
          %s644 = sand.u32 %s192, 1
          %s645 = scalar_lea.sflag [#allocation4], %s644
          %s646 = sand.u32 %s192, 1
          %s647 = smul.addr %s646, 16
          %s648 = scalar_lea.vmem [#allocation3], %s647
          %649 = dma.done %s645, 256
        $region64: #{tpu_custom_call.1} parent=59 // pred_fallthru
          _
      $region60: #{tpu_custom_call.1} parent=5 // pred_fallthru
        _
    $region6: #{tpu_custom_call.1} parent=1 // loop_footer
      %s19 = sadd.s32 1, %s15
    $region7: #{tpu_custom_call.1} parent=1 // loop_footer_branch
      %14 = sbr.rel target = $region3
    $region8: #{tpu_custom_call.1} parent=1 // loop_exit
      _
    %650 = vsyncpa [#allocation4], 1
    %s651 = scalar_lea.sflag [#allocation4], 1
    %652 = vsyncpa %s651, 1

</llo_original>
